<compile_context>
chip_gen: v5e
topology: v5e:2x2
jax: 0.10.0
libtpu: 0.0.40
codegen_flags: <defaults>
</compile_context>

<pallas_src>
import jax
import jax.numpy as jnp
from jax import lax
from jax.experimental import pallas as pl
from jax.experimental.pallas import tpu as pltpu

_HALO = 128  # lane width of the halo view block (requires pad <= _HALO)


def _round8(n):
    return max(((n + 7) // 8) * 8, 8)


def _vmem_budget():
    """Per-generation scoped-VMEM limit + working budget for tile selection."""
    try:
        cap = int(pltpu.get_tpu_info().vmem_capacity_bytes)
    except Exception:
        cap = 64 << 20  # conservative (v7x-sized) fallback
    vmem_limit = int(min((cap * 3) // 4, 96 << 20))  # v5e/v6e ~96MiB, v7x ~48MiB
    budget = vmem_limit // 2                          # headroom for compiler temps
    return vmem_limit, budget


def _tiled_footprint(Bt, Lt, C_in, C_out, K, xb, cb):
    """Per-grid-step VMEM estimate: double-buffered blocks + scratch + temps."""
    x_blk = Bt * C_in * Lt * xb
    halo = Bt * C_in * _HALO * xb
    out_blk = Bt * C_out * Lt * xb
    w = K * C_out * C_in * cb
    bias = _round8(C_out) * 128 * 4
    xw = _round8(C_in) * (_HALO + Lt) * cb        # widened-window scratch
    acc = _round8(C_out) * Lt * 4                 # f32 accumulator
    tap = _round8(C_in) * Lt * cb                 # relayout temp for a shifted tap
    return 2 * (x_blk + halo + out_blk + w + bias) + xw + acc + tap


def _choose_tiles(B, Lp, C_in, C_out, K, xb, cb, budget, max_l_tile):
    """Largest L tile (multiple of 128, divides Lp) then largest batch fold Bt<=8
    that fit the VMEM working budget."""
    cands = [c for c in (16384, 8192, 4096, 2048, 1024, 512, 256, 128) if Lp % c == 0]
    if Lp <= 16384 and Lp not in cands:
        cands.append(Lp)
    if max_l_tile is not None:
        cands = [c for c in cands if c <= max_l_tile]
    if not cands:
        cands = [128]
    cands = sorted(set(cands), reverse=True)
    Lt = cands[-1]
    for c in cands:
        if _tiled_footprint(1, c, C_in, C_out, K, xb, cb) <= budget:
            Lt = c
            break
    Bt = 1
    for d in range(min(B, 8), 0, -1):
        if B % d == 0 and _tiled_footprint(d, Lt, C_in, C_out, K, xb, cb) <= budget:
            Bt = d
            break
    return Lt, Bt


def _make_tiled_kernel(K, pad, C_in, C_out, Lt, Bt, cdtype):
    """Canonical causal path (pad == K-1).  Grid (B//Bt, L/Lt), both axes parallel.
    xw scratch = [128-col halo | x tile]; tap k is a static slice xw[:, 128-z : 128-z+Lt]
    with z = pad - k; K accumulating MXU dots into one f32 accumulator."""

    def kernel(xt_ref, hx_ref, w_ref, b_ref, o_ref, xw_ref):
        j = pl.program_id(1)
        bias = b_ref[...]                                     # (C_out, 1) f32
        for bb in range(Bt):
            halo = hx_ref[bb, :, :]                           # (C_in, 128)
            # At the first L tile the halo IS the causal left padding -> zeros.
            halo = jnp.where(j > 0, halo, jnp.zeros_like(halo))
            xw_ref[:, 0:_HALO] = halo.astype(cdtype)          # lane-aligned store
            xw_ref[:, _HALO:_HALO + Lt] = xt_ref[bb, :, :].astype(cdtype)
            acc = jnp.zeros((C_out, Lt), jnp.float32)
            for k in range(K):
                z = pad - k                                   # static shift, 0..pad
                tap = xw_ref[:, _HALO - z:_HALO - z + Lt]     # (C_in, Lt)
                acc = acc + jnp.dot(w_ref[k], tap,
                                    preferred_element_type=jnp.float32)
            o_ref[bb, :, :] = (acc + bias).astype(o_ref.dtype)

    return kernel


def _make_general_kernel(K, pad, C_in, C_out, L, L_out, cdtype):
    """Fallback for non-canonical padding (pad != K-1, including pad=0):
    one output tile per batch element, left padding materialized in-kernel."""

    def kernel(x_ref, w_ref, b_ref, o_ref, xw_ref):
        if pad > 0:
            xw_ref[:, 0:pad] = jnp.zeros((C_in, pad), cdtype)
        xw_ref[:, pad:pad + L] = x_ref[0, :, :].astype(cdtype)
        bias = b_ref[...]
        acc = jnp.zeros((C_out, L_out), jnp.float32)
        for k in range(K):
            acc = acc + jnp.dot(w_ref[k], xw_ref[:, k:k + L_out],
                                preferred_element_type=jnp.float32)
        o_ref[0, :, :] = (acc + bias).astype(o_ref.dtype)

    return kernel


def causal_conv1d(x, weight, bias, pad, *, compute_dtype=None, max_l_tile=None):
    """x:(B,C_in,L), weight:(C_out,C_in,K), bias:(C_out,) -> (B,C_out,L+pad-K+1)."""
    B, C_in, L = x.shape
    C_out, C_in_w, K = weight.shape
    if C_in_w != C_in:
        raise NotImplementedError("groups > 1 is not supported")  # TODO(synk)
    L_out = L + pad - K + 1
    if L_out <= 0:
        raise ValueError(f"non-positive output length: L={L}, K={K}, pad={pad}")
    if bias is None:
        bias = jnp.zeros((C_out,), x.dtype)

    cdtype = jnp.dtype(compute_dtype) if compute_dtype is not None else jnp.dtype(x.dtype)
    xb, cb = jnp.dtype(x.dtype).itemsize, cdtype.itemsize

    # Tiny host-side weight/bias reshape only (no wrapper transposes of x / y).
    w_taps = jnp.transpose(weight, (2, 0, 1)).astype(cdtype)   # (K, C_out, C_in)
    b2 = bias.astype(jnp.float32).reshape(C_out, 1)

    vmem_limit, budget = _vmem_budget()
    canonical = (pad == K - 1) and (pad <= _HALO)

    if canonical:
        # Right-pad L up to a lane multiple: causal => padded columns cannot affect
        # the kept outputs; keeps every output store lane-dense (128-multiple).
        Lp = ((L + 127) // 128) * 128
        xp = x if Lp == L else jnp.pad(x, ((0, 0), (0, 0), (0, Lp - L)))
        Lt, Bt = _choose_tiles(B, Lp, C_in, C_out, K, xb, cb, budget, max_l_tile)
        nL = Lp // Lt
        nb = _HALO // 128  # halo blocks per 128 lanes (== 1)

        cost = pl.CostEstimate(
            flops=int(2 * B * C_out * K * C_in * L_out),
            transcendentals=0,
            bytes_accessed=int(B * C_in * L * xb + K * C_out * C_in * cb
                               + B * C_out * L_out * xb))

        out = pl.pallas_call(
            _make_tiled_kernel(K, pad, C_in, C_out, Lt, Bt, cdtype),
            out_shape=jax.ShapeDtypeStruct((B, C_out, Lp), x.dtype),
            grid=(B // Bt, nL),
            in_specs=[
                # Main x tile.
                pl.BlockSpec((Bt, C_in, Lt), lambda b, j: (b, 0, j)),
                # 128-wide halo view of x: the block ending at this tile's left edge
                # (clamped to block 0 at j==0, where it is zeroed in-kernel).
                pl.BlockSpec((Bt, C_in, _HALO),
                             lambda b, j: (b, 0, jnp.maximum(j * (Lt // 128) - nb, 0))),
                pl.BlockSpec((K, C_out, C_in), lambda b, j: (0, 0, 0)),
                pl.BlockSpec((C_out, 1), lambda b, j: (0, 0)),
            ],
            out_specs=pl.BlockSpec((Bt, C_out, Lt), lambda b, j: (b, 0, j)),
            scratch_shapes=[pltpu.VMEM((C_in, _HALO + Lt), cdtype)],
            compiler_params=pltpu.CompilerParams(
                # No carried state -> both axes parallel (v7x 2-TC friendly).
                dimension_semantics=("parallel", "parallel"),
                vmem_limit_bytes=vmem_limit),
            cost_estimate=cost,
        )(xp, xp, w_taps, b2)
        return out[:, :, :L_out] if Lp != L_out else out

    # Non-canonical padding: single L tile per batch element (any pad >= 0).
    foot = (2 * (C_in * L + C_out * L_out) * xb
            + _round8(C_in) * (pad + L) * cb
            + _round8(C_out) * L_out * 4
            + 2 * K * C_out * C_in * cb)
    if foot > budget:
        # TODO(synk): tile the non-causal (pad != K-1) configuration over L.
        raise NotImplementedError("pad != kernel_size-1 with long sequences is not tiled")

    out = pl.pallas_call(
        _make_general_kernel(K, pad, C_in, C_out, L, L_out, cdtype),
        out_shape=jax.ShapeDtypeStruct((B, C_out, L_out), x.dtype),
        grid=(B,),
        in_specs=[
            pl.BlockSpec((1, C_in, L), lambda b: (b, 0, 0)),
            pl.BlockSpec((K, C_out, C_in), lambda b: (0, 0, 0)),
            pl.BlockSpec((C_out, 1), lambda b: (0, 0)),
        ],
        out_specs=pl.BlockSpec((1, C_out, L_out), lambda b: (b, 0, 0)),
        scratch_shapes=[pltpu.VMEM((C_in, pad + L), cdtype)],
        compiler_params=pltpu.CompilerParams(
            dimension_semantics=("parallel",), vmem_limit_bytes=vmem_limit),
    )(x, w_taps, b2)
    return out


def _reference(x, weight, bias, pad):
    """Plain-JAX replica of the PyTorch forward (Conv1d + causal crop)."""
    y = lax.conv_general_dilated(
        x, weight,
        window_strides=(1,),
        padding=[(pad, pad)],
        dimension_numbers=("NCH", "OIH", "NCH"),
    )
    y = y + bias[None, :, None]
    if pad > 0:
        y = y[:, :, :-pad]
    return y


if __name__ == "__main__":
    B, C_in, C_out, K = 2, 4, 8, 3
    pad = K - 1                      # canonical causal padding
    groups = 1

    key = jax.random.PRNGKey(0)
    kx, kw, kb, kx2, kx3 = jax.random.split(key, 5)

    # nn.Conv1d-style U(-sqrt(k), sqrt(k)) init, k = groups / (C_in * kernel_size)
    bound = (groups / (C_in * K)) ** 0.5
    weight = jax.random.uniform(kw, (C_out, C_in, K), minval=-bound, maxval=bound,
                                dtype=jnp.float32)
    bias = jax.random.uniform(kb, (C_out,), minval=-bound, maxval=bound,
                              dtype=jnp.float32)

    # 1) Small causal case (single L tile, batch folded into one grid step).
    L = 16
    x = jax.random.normal(kx, (B, C_in, L), dtype=jnp.float32)
    y = jax.block_until_ready(causal_conv1d(x, weight, bias, pad))
    y_ref = _reference(x, weight, bias, pad)
    assert y.shape == y_ref.shape, (y.shape, y_ref.shape)
    assert jnp.allclose(y, y_ref, atol=1e-5, rtol=1e-5), "mismatch (small causal)"

    # 2) Longer causal case, forced multi-tile (exercises halo reads across L tiles).
    L2 = 1024
    x2 = jax.random.normal(kx2, (B, C_in, L2), dtype=jnp.float32)
    y2 = jax.block_until_ready(causal_conv1d(x2, weight, bias, pad, max_l_tile=256))
    y2_ref = _reference(x2, weight, bias, pad)
    assert y2.shape == y2_ref.shape, (y2.shape, y2_ref.shape)
    assert jnp.allclose(y2, y2_ref, atol=1e-5, rtol=1e-5), "mismatch (multi-tile causal)"

    # 3) bf16 MXU operands (f32 accumulation) on the same case.
    y3 = jax.block_until_ready(
        causal_conv1d(x2, weight, bias, pad, compute_dtype=jnp.bfloat16, max_l_tile=256))
    assert jnp.allclose(y3, y2_ref, atol=5e-2, rtol=5e-2), "mismatch (bf16 operands)"

    # 4) Ragged L (right-padded to a lane multiple inside the wrapper).
    L3 = 200
    x3 = jax.random.normal(kx3, (B, C_in, L3), dtype=jnp.float32)
    y4 = jax.block_until_ready(causal_conv1d(x3, weight, bias, pad))
    y4_ref = _reference(x3, weight, bias, pad)
    assert y4.shape == y4_ref.shape, (y4.shape, y4_ref.shape)
    assert jnp.allclose(y4, y4_ref, atol=1e-5, rtol=1e-5), "mismatch (ragged L)"

    # 5) Non-canonical padding (pad=0) exercises the general fallback kernel.
    y5 = jax.block_until_ready(causal_conv1d(x, weight, bias, 0))
    y5_ref = _reference(x, weight, bias, 0)
    assert y5.shape == y5_ref.shape, (y5.shape, y5_ref.shape)
    assert jnp.allclose(y5, y5_ref, atol=1e-5, rtol=1e-5), "mismatch (pad=0 fallback)"

    print("KERNEL_OK")
</pallas_src>

<mosaic_0001>
module attributes {stable_mosaic.version = 11 : i64} {
  func.func @kernel(%arg0: i32, %arg1: i32, %arg2: memref<2x4x128xf32, #tpu.memory_space<vmem>>, %arg3: memref<2x4x128xf32, #tpu.memory_space<vmem>>, %arg4: memref<3x8x4xf32, #tpu.memory_space<vmem>>, %arg5: memref<8x1xf32, #tpu.memory_space<vmem>>, %arg6: memref<2x8x128xf32, #tpu.memory_space<vmem>>, %arg7: memref<4x256xf32, #tpu.memory_space<vmem>>) attributes {dimension_semantics = [#tpu.dimension_semantics<parallel>, #tpu.dimension_semantics<parallel>], iteration_bounds = array<i64: 1, 1>, scalar_prefetch = 0 : i64, scratch_operands = 1 : i64, tpu.core_type = #tpu.core_type<tc>, window_params = [{transform_indices = @transform_0, window_bounds = array<i64: 2, 4, 128>}, {transform_indices = @transform_1, window_bounds = array<i64: 2, 4, 128>}, {pipeline_mode = #tpu.pipeline_mode<synchronous>, transform_indices = @transform_2, window_bounds = array<i64: 3, 8, 4>}, {pipeline_mode = #tpu.pipeline_mode<synchronous>, transform_indices = @transform_3, window_bounds = array<i64: 8, 1>}, {transform_indices = @transform_4, window_bounds = array<i64: 2, 8, 128>}]} {
    %c0 = arith.constant 0 : index
    %c0_0 = arith.constant 0 : index
    %0 = vector.load %arg5[%c0, %c0_0] : memref<8x1xf32, #tpu.memory_space<vmem>>, vector<8x1xf32>
    %c0_1 = arith.constant 0 : index
    %c0_2 = arith.constant 0 : index
    %c0_3 = arith.constant 0 : index
    %1 = vector.load %arg3[%c0_1, %c0_2, %c0_3] : memref<2x4x128xf32, #tpu.memory_space<vmem>>, vector<1x4x128xf32>
    %2 = vector.shape_cast %1 : vector<1x4x128xf32> to vector<4x128xf32>
    %c0_i32 = arith.constant 0 : i32
    %3 = arith.cmpi sgt, %arg1, %c0_i32 : i32
    %cst = arith.constant 0.000000e+00 : f32
    %4 = vector.broadcast %cst : f32 to vector<4x128xf32>
    %5 = arith.select %3, %2, %4 : vector<4x128xf32>
    %c0_4 = arith.constant 0 : index
    %c0_5 = arith.constant 0 : index
    %6 = vector.load %arg7[%c0_4, %c0_5] : memref<4x256xf32, #tpu.memory_space<vmem>>, vector<4x128xf32>
    tpu.vector_store %arg7[%c0_4, %c0_5], %5 {strides = array<i32>} : memref<4x256xf32, #tpu.memory_space<vmem>>, vector<4x128xf32>,
    %c0_6 = arith.constant 0 : index
    %c0_7 = arith.constant 0 : index
    %c0_8 = arith.constant 0 : index
    %7 = vector.load %arg2[%c0_6, %c0_7, %c0_8] : memref<2x4x128xf32, #tpu.memory_space<vmem>>, vector<1x4x128xf32>
    %8 = vector.shape_cast %7 : vector<1x4x128xf32> to vector<4x128xf32>
    %c0_9 = arith.constant 0 : index
    %c128 = arith.constant 128 : index
    %9 = vector.load %arg7[%c0_9, %c128] : memref<4x256xf32, #tpu.memory_space<vmem>>, vector<4x128xf32>
    tpu.vector_store %arg7[%c0_9, %c128], %8 {strides = array<i32>} : memref<4x256xf32, #tpu.memory_space<vmem>>, vector<4x128xf32>,
    %cst_10 = arith.constant 0.000000e+00 : f32
    %10 = vector.broadcast %cst_10 : f32 to vector<8x128xf32>
    %c0_11 = arith.constant 0 : index
    %c126 = arith.constant 126 : index
    %11 = vector.load %arg7[%c0_11, %c126] : memref<4x256xf32, #tpu.memory_space<vmem>>, vector<4x128xf32>
    %c0_12 = arith.constant 0 : index
    %c0_13 = arith.constant 0 : index
    %c0_14 = arith.constant 0 : index
    %12 = vector.load %arg4[%c0_12, %c0_13, %c0_14] : memref<3x8x4xf32, #tpu.memory_space<vmem>>, vector<1x8x4xf32>
    %13 = vector.shape_cast %12 : vector<1x8x4xf32> to vector<8x4xf32>
    %cst_15 = arith.constant dense<0.000000e+00> : vector<8x128xf32>
    %14 = tpu.matmul %13, %11, %cst_15 {dimension_numbers = #tpu.dot_dimension_numbers<[1], [0], [0], [1], [0, 0, 1, 1], [], []>} : vector<8x4xf32>, vector<4x128xf32>, vector<8x128xf32> -> vector<8x128xf32>
    %15 = arith.addf %10, %14 : vector<8x128xf32>
    %c0_16 = arith.constant 0 : index
    %c127 = arith.constant 127 : index
    %16 = vector.load %arg7[%c0_16, %c127] : memref<4x256xf32, #tpu.memory_space<vmem>>, vector<4x128xf32>
    %c1 = arith.constant 1 : index
    %c0_17 = arith.constant 0 : index
    %c0_18 = arith.constant 0 : index
    %17 = vector.load %arg4[%c1, %c0_17, %c0_18] : memref<3x8x4xf32, #tpu.memory_space<vmem>>, vector<1x8x4xf32>
    %18 = vector.shape_cast %17 : vector<1x8x4xf32> to vector<8x4xf32>
    %cst_19 = arith.constant dense<0.000000e+00> : vector<8x128xf32>
    %19 = tpu.matmul %18, %16, %cst_19 {dimension_numbers = #tpu.dot_dimension_numbers<[1], [0], [0], [1], [0, 0, 1, 1], [], []>} : vector<8x4xf32>, vector<4x128xf32>, vector<8x128xf32> -> vector<8x128xf32>
    %20 = arith.addf %15, %19 : vector<8x128xf32>
    %c0_20 = arith.constant 0 : index
    %c128_21 = arith.constant 128 : index
    %21 = vector.load %arg7[%c0_20, %c128_21] : memref<4x256xf32, #tpu.memory_space<vmem>>, vector<4x128xf32>
    %c2 = arith.constant 2 : index
    %c0_22 = arith.constant 0 : index
    %c0_23 = arith.constant 0 : index
    %22 = vector.load %arg4[%c2, %c0_22, %c0_23] : memref<3x8x4xf32, #tpu.memory_space<vmem>>, vector<1x8x4xf32>
    %23 = vector.shape_cast %22 : vector<1x8x4xf32> to vector<8x4xf32>
    %cst_24 = arith.constant dense<0.000000e+00> : vector<8x128xf32>
    %24 = tpu.matmul %23, %21, %cst_24 {dimension_numbers = #tpu.dot_dimension_numbers<[1], [0], [0], [1], [0, 0, 1, 1], [], []>} : vector<8x4xf32>, vector<4x128xf32>, vector<8x128xf32> -> vector<8x128xf32>
    %25 = arith.addf %20, %24 : vector<8x128xf32>
    %26 = vector.broadcast %0 : vector<8x1xf32> to vector<8x128xf32>
    %27 = arith.addf %25, %26 : vector<8x128xf32>
    %c0_25 = arith.constant 0 : index
    %c0_26 = arith.constant 0 : index
    %c0_27 = arith.constant 0 : index
    %28 = vector.load %arg6[%c0_25, %c0_26, %c0_27] : memref<2x8x128xf32, #tpu.memory_space<vmem>>, vector<1x8x128xf32>
    %29 = vector.shape_cast %28 : vector<1x8x128xf32> to vector<8x128xf32>
    %30 = vector.shape_cast %27 : vector<8x128xf32> to vector<1x8x128xf32>
    tpu.vector_store %arg6[%c0_25, %c0_26, %c0_27], %30 {strides = array<i32>} : memref<2x8x128xf32, #tpu.memory_space<vmem>>, vector<1x8x128xf32>,
    %c1_28 = arith.constant 1 : index
    %c0_29 = arith.constant 0 : index
    %c0_30 = arith.constant 0 : index
    %31 = vector.load %arg3[%c1_28, %c0_29, %c0_30] : memref<2x4x128xf32, #tpu.memory_space<vmem>>, vector<1x4x128xf32>
    %32 = vector.shape_cast %31 : vector<1x4x128xf32> to vector<4x128xf32>
    %c0_i32_31 = arith.constant 0 : i32
    %33 = arith.cmpi sgt, %arg1, %c0_i32_31 : i32
    %cst_32 = arith.constant 0.000000e+00 : f32
    %34 = vector.broadcast %cst_32 : f32 to vector<4x128xf32>
    %35 = arith.select %33, %32, %34 : vector<4x128xf32>
    %c0_33 = arith.constant 0 : index
    %c0_34 = arith.constant 0 : index
    %36 = vector.load %arg7[%c0_33, %c0_34] : memref<4x256xf32, #tpu.memory_space<vmem>>, vector<4x128xf32>
    tpu.vector_store %arg7[%c0_33, %c0_34], %35 {strides = array<i32>} : memref<4x256xf32, #tpu.memory_space<vmem>>, vector<4x128xf32>,
    %c1_35 = arith.constant 1 : index
    %c0_36 = arith.constant 0 : index
    %c0_37 = arith.constant 0 : index
    %37 = vector.load %arg2[%c1_35, %c0_36, %c0_37] : memref<2x4x128xf32, #tpu.memory_space<vmem>>, vector<1x4x128xf32>
    %38 = vector.shape_cast %37 : vector<1x4x128xf32> to vector<4x128xf32>
    %c0_38 = arith.constant 0 : index
    %c128_39 = arith.constant 128 : index
    %39 = vector.load %arg7[%c0_38, %c128_39] : memref<4x256xf32, #tpu.memory_space<vmem>>, vector<4x128xf32>
    tpu.vector_store %arg7[%c0_38, %c128_39], %38 {strides = array<i32>} : memref<4x256xf32, #tpu.memory_space<vmem>>, vector<4x128xf32>,
    %cst_40 = arith.constant 0.000000e+00 : f32
    %40 = vector.broadcast %cst_40 : f32 to vector<8x128xf32>
    %c0_41 = arith.constant 0 : index
    %c126_42 = arith.constant 126 : index
    %41 = vector.load %arg7[%c0_41, %c126_42] : memref<4x256xf32, #tpu.memory_space<vmem>>, vector<4x128xf32>
    %c0_43 = arith.constant 0 : index
    %c0_44 = arith.constant 0 : index
    %c0_45 = arith.constant 0 : index
    %42 = vector.load %arg4[%c0_43, %c0_44, %c0_45] : memref<3x8x4xf32, #tpu.memory_space<vmem>>, vector<1x8x4xf32>
    %43 = vector.shape_cast %42 : vector<1x8x4xf32> to vector<8x4xf32>
    %cst_46 = arith.constant dense<0.000000e+00> : vector<8x128xf32>
    %44 = tpu.matmul %43, %41, %cst_46 {dimension_numbers = #tpu.dot_dimension_numbers<[1], [0], [0], [1], [0, 0, 1, 1], [], []>} : vector<8x4xf32>, vector<4x128xf32>, vector<8x128xf32> -> vector<8x128xf32>
    %45 = arith.addf %40, %44 : vector<8x128xf32>
    %c0_47 = arith.constant 0 : index
    %c127_48 = arith.constant 127 : index
    %46 = vector.load %arg7[%c0_47, %c127_48] : memref<4x256xf32, #tpu.memory_space<vmem>>, vector<4x128xf32>
    %c1_49 = arith.constant 1 : index
    %c0_50 = arith.constant 0 : index
    %c0_51 = arith.constant 0 : index
    %47 = vector.load %arg4[%c1_49, %c0_50, %c0_51] : memref<3x8x4xf32, #tpu.memory_space<vmem>>, vector<1x8x4xf32>
    %48 = vector.shape_cast %47 : vector<1x8x4xf32> to vector<8x4xf32>
    %cst_52 = arith.constant dense<0.000000e+00> : vector<8x128xf32>
    %49 = tpu.matmul %48, %46, %cst_52 {dimension_numbers = #tpu.dot_dimension_numbers<[1], [0], [0], [1], [0, 0, 1, 1], [], []>} : vector<8x4xf32>, vector<4x128xf32>, vector<8x128xf32> -> vector<8x128xf32>
    %50 = arith.addf %45, %49 : vector<8x128xf32>
    %c0_53 = arith.constant 0 : index
    %c128_54 = arith.constant 128 : index
    %51 = vector.load %arg7[%c0_53, %c128_54] : memref<4x256xf32, #tpu.memory_space<vmem>>, vector<4x128xf32>
    %c2_55 = arith.constant 2 : index
    %c0_56 = arith.constant 0 : index
    %c0_57 = arith.constant 0 : index
    %52 = vector.load %arg4[%c2_55, %c0_56, %c0_57] : memref<3x8x4xf32, #tpu.memory_space<vmem>>, vector<1x8x4xf32>
    %53 = vector.shape_cast %52 : vector<1x8x4xf32> to vector<8x4xf32>
    %cst_58 = arith.constant dense<0.000000e+00> : vector<8x128xf32>
    %54 = tpu.matmul %53, %51, %cst_58 {dimension_numbers = #tpu.dot_dimension_numbers<[1], [0], [0], [1], [0, 0, 1, 1], [], []>} : vector<8x4xf32>, vector<4x128xf32>, vector<8x128xf32> -> vector<8x128xf32>
    %55 = arith.addf %50, %54 : vector<8x128xf32>
    %56 = vector.broadcast %0 : vector<8x1xf32> to vector<8x128xf32>
    %57 = arith.addf %55, %56 : vector<8x128xf32>
    %c1_59 = arith.constant 1 : index
    %c0_60 = arith.constant 0 : index
    %c0_61 = arith.constant 0 : index
    %58 = vector.load %arg6[%c1_59, %c0_60, %c0_61] : memref<2x8x128xf32, #tpu.memory_space<vmem>>, vector<1x8x128xf32>
    %59 = vector.shape_cast %58 : vector<1x8x128xf32> to vector<8x128xf32>
    %60 = vector.shape_cast %57 : vector<8x128xf32> to vector<1x8x128xf32>
    tpu.vector_store %arg6[%c1_59, %c0_60, %c0_61], %60 {strides = array<i32>} : memref<2x8x128xf32, #tpu.memory_space<vmem>>, vector<1x8x128xf32>,
    return
  }
  func.func @transform_0(%arg0: i32, %arg1: i32) -> (i32, i32, i32) {
    %c0_i32 = arith.constant 0 : i32
    %c0_i32_0 = arith.constant 0 : i32
    return %arg0, %c0_i32, %arg1 : i32, i32, i32
  }
  func.func @transform_1(%arg0: i32, %arg1: i32) -> (i32, i32, i32) {
    %c1_i32 = arith.constant 1 : i32
    %0 = arith.muli %arg1, %c1_i32 : i32
    %c1_i32_0 = arith.constant 1 : i32
    %1 = arith.subi %0, %c1_i32_0 : i32
    %c0_i32 = arith.constant 0 : i32
    %2 = arith.maxsi %1, %c0_i32 : i32
    %c0_i32_1 = arith.constant 0 : i32
    %c0_i32_2 = arith.constant 0 : i32
    return %arg0, %c0_i32_1, %2 : i32, i32, i32
  }
  func.func @transform_2(%arg0: i32, %arg1: i32) -> (i32, i32, i32) {
    %c0_i32 = arith.constant 0 : i32
    %c0_i32_0 = arith.constant 0 : i32
    %c0_i32_1 = arith.constant 0 : i32
    %c0_i32_2 = arith.constant 0 : i32
    return %c0_i32, %c0_i32_0, %c0_i32_1 : i32, i32, i32
  }
  func.func @transform_3(%arg0: i32, %arg1: i32) -> (i32, i32) {
    %c0_i32 = arith.constant 0 : i32
    %c0_i32_0 = arith.constant 0 : i32
    %c0_i32_1 = arith.constant 0 : i32
    return %c0_i32, %c0_i32_0 : i32, i32
  }
  func.func @transform_4(%arg0: i32, %arg1: i32) -> (i32, i32, i32) {
    %c0_i32 = arith.constant 0 : i32
    %c0_i32_0 = arith.constant 0 : i32
    return %arg0, %c0_i32, %arg1 : i32, i32, i32
  }
}

</mosaic_0001>

<llo_original>
// kernel: tpu_custom_call.1
$region0: #{tpu_custom_call.1}
  #allocation0 [shape = 'u32[]', space=smem, size = 0x4, offset = 0x4, fixed_abs, tag = 'smem constant byte address 0x4 - core index']
  #allocation1 [shape = 'u32[72,128]{1,0:T(1,128)}', space=vmem, size = 0x9000, scoped, tag = 'internal scratch']
  #allocation2 [shape = 'f32[4,256]{1,0:T(4,128)}', space=vmem, size = 0x1000, scoped, tag = 'scratch operand']
  %s0 = inlined_call_operand.vmem [shape: f32[2,4,128], index: 0, kind: input, shape index: {}]
  %s1 = inlined_call_operand.vmem [shape: f32[2,4,128], index: 1, kind: input, shape index: {}]
  %s2 = inlined_call_operand.vmem [shape: f32[3,8,4], index: 2, kind: input, shape index: {}]
  %s3 = inlined_call_operand.vmem [shape: f32[8,1], index: 3, kind: input, shape index: {}]
  %s4 = inlined_call_operand.hbm [shape: f32[2,8,128], index: 4, kind: output, shape index: {}]
  %s5 = sld [smem:[#allocation0]]
  $region26: #{tpu_custom_call.1} parent=0
    _
  %s7 = ssub.s32 1, %s5
  %s8 = scalar_select 0, %s7, %s5
  $region1: #{tpu_custom_call.1} parent=0
    #allocation3 [shape = 'u8[8192]{0}', space=vmem, size = 0x2000, scoped, tag = 'output window, operand 0, single buffered']
    #allocation4 [shape = 's32[1]{0}', space=sflag, size = 0x4, scoped, tag = 'scoped memory for tpu_custom_call.1']
    %9 = vsyncpa [#allocation4], 0
    // Predicated region
    $region2: #{tpu_custom_call.1} parent=1 // pred_check
      _
    $region3: #{tpu_custom_call.1} parent=1 // pred_check_branch
      %11 = sbr.rel (0) target = $region5
    $region4: #{tpu_custom_call.1} parent=1 // pred_region
      _
    $region5: #{tpu_custom_call.1} parent=1 // pred_fallthru
      _
    // Predicated region
    $region6: #{tpu_custom_call.1} parent=1 // pred_check
      _
    $region7: #{tpu_custom_call.1} parent=1 // pred_check_branch
      %13 = sbr.rel (0) target = $region9
    $region8: #{tpu_custom_call.1} parent=1 // pred_region
      %s14 = ssub.s32 0, 1
      %p15 = scmp.gt.s32.totalorder %s14, 0
      %s16 = scalar_select %p15, %s14, 0
      %p17 = scmp.lt.s32.totalorder %s16, 0
      %s18 = scalar_select %p17, %s16, 0
      %s19 = smul.addr %s18, 4
      %s20 = scalar_lea.vmem %s1, %s19
      %s21 = ssub.s32 0, 1
      %p22 = scmp.gt.s32.totalorder %s21, 0
      %s23 = scalar_select %p22, %s21, 0
    $region9: #{tpu_custom_call.1} parent=1 // pred_fallthru
      _
    // Predicated region
    $region10: #{tpu_custom_call.1} parent=1 // pred_check
      _
    $region11: #{tpu_custom_call.1} parent=1 // pred_check_branch
      %25 = sbr.rel (0) target = $region13
    $region12: #{tpu_custom_call.1} parent=1 // pred_region
      _
    $region13: #{tpu_custom_call.1} parent=1 // pred_fallthru
      _
    // Predicated region
    $region14: #{tpu_custom_call.1} parent=1 // pred_check
      _
    $region15: #{tpu_custom_call.1} parent=1 // pred_check_branch
      %27 = sbr.rel (0) target = $region17
    $region16: #{tpu_custom_call.1} parent=1 // pred_region
      _
    $region17: #{tpu_custom_call.1} parent=1 // pred_fallthru
      _
    %s28 = ssub.s32 0, 1
    %p29 = scmp.gt.s32.totalorder %s28, 0
    %s30 = scalar_select %p29, %s28, 0
    %p31 = scmp.lt.s32.totalorder %s30, 0
    %s32 = scalar_select %p31, %s30, 0
    %s33 = smul.addr %s32, 4
    %s34 = scalar_lea.vmem %s1, %s33
    %s35 = ssub.s32 0, 1
    %p36 = scmp.gt.s32.totalorder %s35, 0
    %s37 = scalar_select %p36, %s35, 0
    %p38 = scmp.lt.s32.totalorder %s37, 0
    %s39 = scalar_select %p38, %s37, 0
    %s40 = smul.addr %s39, 4
    %s41 = scalar_lea.vmem %s1, %s40
    %s42 = ssub.s32 0, 1
    %p43 = scmp.gt.s32.totalorder %s42, 0
    %s44 = scalar_select %p43, %s42, 0
    %v45 = vld [vmem:[%s3] sm:$0xff]
    %v46 = vld [vmem:[%s41] sm:$0xf]
    %p47 = scmp.gt.s32.totalorder 0, 0
    %s48 = scalar_select %p47, 1, 0
    %v49 = vstv %s48
    %vm50 = vcmp.eq.s32.totalorder %v49, 1
    %v51 = vsel %vm50, %v46, 0.0
    %52 = vst [vmem:[#allocation2] sm:$0xf] %v51
    %v53 = vld [vmem:[%s0] sm:$0xf]
    %54 = vst [vmem:[#allocation2 + $0x4] sm:$0xf] %v53
    %v55 = vld [vmem:[#allocation2] sm:$0xff]
    %v56 = vld [vmem:[%s2] sm:$0xff]
    %s57 = scalar_lea.vmem %s2, 8
    %v58 = vld [vmem:[%s57] sm:$0xff]
    %60 = vst [vmem:[#allocation1] ss:$2 sm:$0xff] %v55
    %v61 = vld.sshfl [vmem:[#allocation1] sm:$0xff pattern:$0x75316420]
    %v62 = vld.sshfl [vmem:[#allocation1 + $0x8] sm:$0xff pattern:$0x75316420]
    %63 = vrot.lane.b32.xlu0 %v61, 1
    %v64 = vpop.permute.xlu0 %63
    %65 = vrot.lane.b32.xlu0 %v62, 1
    %v66 = vpop.permute.xlu0 %65
    %vm67 = vcmask 7168
    %v68 = vsel %vm67, %v64, %v66
    %vm69 = vcmask 31744
    %v71 = vsel %vm69, %v58, 0
    %vm73 = vcmask 1043456
    %v74 = vsel %vm73, %v68, 0
    %76 = vmatpush.msra.mxu0 0.0
    %77 = vmatpush.msra.mxu0 0.0
    %78 = vmatpush.msra.mxu0 0.0
    %79 = vmatpush.msra.mxu0 0.0
    %80 = vmatpush.msra.mxu0 0.0
    %81 = vmatpush.msra.mxu0 0.0
    %82 = vmatpush.msra.mxu0 0.0
    %83 = vmatpush.msra.mxu0 0.0
    %84 = vmatpush.msra.mxu0 0.0
    %85 = vmatpush.msra.mxu0 0.0
    %86 = vmatpush.msra.mxu0 0.0
    %87 = vmatpush.msra.mxu0 0.0
    %88 = vmatpush.msra.mxu0 0.0
    %89 = vmatpush.msra.mxu0 0.0
    %90 = vmatpush.msra.mxu0 0.0
    %91 = vmatpush.msra.mxu0 %v74
    %92 = vmatmul.f32.gmra.mxu0 %v71
    %v93 = vpop.f32.mrf.mxu0
    %v94 = vadd.f32 0.0, %v93
    %95 = vdwg.mxu0
    %96 = vst [vmem:[#allocation1] ss:$2 sm:$0xff] %v55
    %v97 = vld.sshfl [vmem:[#allocation1] sm:$0xff pattern:$0x75316420]
    %v98 = vld.sshfl [vmem:[#allocation1 + $0x8] sm:$0xff pattern:$0x75316420]
    %99 = vrot.lane.b32.xlu0 %v97, 2
    %v100 = vpop.permute.xlu0 %99
    %101 = vrot.lane.b32.xlu0 %v98, 2
    %v102 = vpop.permute.xlu0 %101
    %vm103 = vcmask 15360
    %v104 = vsel %vm103, %v100, %v102
    %v106 = vsel %vm69, %v56, 0
    %v108 = vsel %vm73, %v104, 0
    %110 = vmatpush.msra.mxu0 0.0
    %111 = vmatpush.msra.mxu0 0.0
    %112 = vmatpush.msra.mxu0 0.0
    %113 = vmatpush.msra.mxu0 0.0
    %114 = vmatpush.msra.mxu0 0.0
    %115 = vmatpush.msra.mxu0 0.0
    %116 = vmatpush.msra.mxu0 0.0
    %117 = vmatpush.msra.mxu0 0.0
    %118 = vmatpush.msra.mxu0 0.0
    %119 = vmatpush.msra.mxu0 0.0
    %120 = vmatpush.msra.mxu0 0.0
    %121 = vmatpush.msra.mxu0 0.0
    %122 = vmatpush.msra.mxu0 0.0
    %123 = vmatpush.msra.mxu0 0.0
    %124 = vmatpush.msra.mxu0 0.0
    %125 = vmatpush.msra.mxu0 %v108
    %126 = vmatmul.f32.gmra.mxu0 %v106
    %v127 = vpop.f32.mrf.mxu0
    %v128 = vadd.f32 %v94, %v127
    %129 = vdwg.mxu0
    %v130 = vld [vmem:[#allocation2 + $0x4] sm:$0xf]
    %s131 = scalar_lea.vmem %s2, 16
    %v132 = vld [vmem:[%s131] sm:$0xff]
    %v134 = vsel %vm69, %v132, 0
    %v137 = vsel %vm73, %v130, 0
    %139 = vmatpush.msra.mxu0 0.0
    %140 = vmatpush.msra.mxu0 0.0
    %141 = vmatpush.msra.mxu0 0.0
    %142 = vmatpush.msra.mxu0 0.0
    %143 = vmatpush.msra.mxu0 0.0
    %144 = vmatpush.msra.mxu0 0.0
    %145 = vmatpush.msra.mxu0 0.0
    %146 = vmatpush.msra.mxu0 0.0
    %147 = vmatpush.msra.mxu0 0.0
    %148 = vmatpush.msra.mxu0 0.0
    %149 = vmatpush.msra.mxu0 0.0
    %150 = vmatpush.msra.mxu0 0.0
    %151 = vmatpush.msra.mxu0 0.0
    %152 = vmatpush.msra.mxu0 0.0
    %153 = vmatpush.msra.mxu0 0.0
    %154 = vmatpush.msra.mxu0 %v137
    %155 = vmatmul.f32.gmra.mxu0 %v134
    %v156 = vpop.f32.mrf.mxu0
    %v157 = vadd.f32 0.0, %v156
    %158 = vdwg.mxu0
    %v159 = vadd.f32 %v128, %v157
    %161 = vset.pattern.permute.xlu0 0
    %162 = vperm.xlu0 %161, %v45
    %v163 = vpop.permute.xlu0 %162
    %v165 = vadd.f32 %v159, %v163
    %166 = vst [vmem:[#allocation3] sm:$0xff] %v165
    %s167 = scalar_lea.vmem %s41, 4
    %v168 = vld [vmem:[%s167] sm:$0xf]
    %v169 = vsel %vm50, %v168, 0.0
    %170 = vst [vmem:[#allocation2] sm:$0xf] %v169
    %s171 = scalar_lea.vmem %s0, 4
    %v172 = vld [vmem:[%s171] sm:$0xf]
    %173 = vst [vmem:[#allocation2 + $0x4] sm:$0xf] %v172
    %v174 = vld [vmem:[#allocation2] sm:$0xff]
    %v175 = vld [vmem:[%s2] sm:$0xff]
    %v176 = vld [vmem:[%s57] sm:$0xff]
    %178 = vst [vmem:[#allocation1] ss:$2 sm:$0xff] %v174
    %v179 = vld.sshfl [vmem:[#allocation1] sm:$0xff pattern:$0x75316420]
    %v180 = vld.sshfl [vmem:[#allocation1 + $0x8] sm:$0xff pattern:$0x75316420]
    %181 = vrot.lane.b32.xlu0 %v179, 1
    %v182 = vpop.permute.xlu0 %181
    %183 = vrot.lane.b32.xlu0 %v180, 1
    %v184 = vpop.permute.xlu0 %183
    %v185 = vsel %vm67, %v182, %v184
    %v187 = vsel %vm69, %v176, 0
    %v189 = vsel %vm73, %v185, 0
    %191 = vmatpush.msra.mxu0 0.0
    %192 = vmatpush.msra.mxu0 0.0
    %193 = vmatpush.msra.mxu0 0.0
    %194 = vmatpush.msra.mxu0 0.0
    %195 = vmatpush.msra.mxu0 0.0
    %196 = vmatpush.msra.mxu0 0.0
    %197 = vmatpush.msra.mxu0 0.0
    %198 = vmatpush.msra.mxu0 0.0
    %199 = vmatpush.msra.mxu0 0.0
    %200 = vmatpush.msra.mxu0 0.0
    %201 = vmatpush.msra.mxu0 0.0
    %202 = vmatpush.msra.mxu0 0.0
    %203 = vmatpush.msra.mxu0 0.0
    %204 = vmatpush.msra.mxu0 0.0
    %205 = vmatpush.msra.mxu0 0.0
    %206 = vmatpush.msra.mxu0 %v189
    %207 = vmatmul.f32.gmra.mxu0 %v187
    %v208 = vpop.f32.mrf.mxu0
    %v209 = vadd.f32 0.0, %v208
    %210 = vdwg.mxu0
    %211 = vst [vmem:[#allocation1] ss:$2 sm:$0xff] %v174
    %v212 = vld.sshfl [vmem:[#allocation1] sm:$0xff pattern:$0x75316420]
    %v213 = vld.sshfl [vmem:[#allocation1 + $0x8] sm:$0xff pattern:$0x75316420]
    %214 = vrot.lane.b32.xlu0 %v212, 2
    %v215 = vpop.permute.xlu0 %214
    %216 = vrot.lane.b32.xlu0 %v213, 2
    %v217 = vpop.permute.xlu0 %216
    %v218 = vsel %vm103, %v215, %v217
    %v220 = vsel %vm69, %v175, 0
    %v222 = vsel %vm73, %v218, 0
    %224 = vmatpush.msra.mxu0 0.0
    %225 = vmatpush.msra.mxu0 0.0
    %226 = vmatpush.msra.mxu0 0.0
    %227 = vmatpush.msra.mxu0 0.0
    %228 = vmatpush.msra.mxu0 0.0
    %229 = vmatpush.msra.mxu0 0.0
    %230 = vmatpush.msra.mxu0 0.0
    %231 = vmatpush.msra.mxu0 0.0
    %232 = vmatpush.msra.mxu0 0.0
    %233 = vmatpush.msra.mxu0 0.0
    %234 = vmatpush.msra.mxu0 0.0
    %235 = vmatpush.msra.mxu0 0.0
    %236 = vmatpush.msra.mxu0 0.0
    %237 = vmatpush.msra.mxu0 0.0
    %238 = vmatpush.msra.mxu0 0.0
    %239 = vmatpush.msra.mxu0 %v222
    %240 = vmatmul.f32.gmra.mxu0 %v220
    %v241 = vpop.f32.mrf.mxu0
    %v242 = vadd.f32 %v209, %v241
    %243 = vdwg.mxu0
    %v244 = vld [vmem:[#allocation2 + $0x4] sm:$0xf]
    %v245 = vld [vmem:[%s131] sm:$0xff]
    %v247 = vsel %vm69, %v245, 0
    %v250 = vsel %vm73, %v244, 0
    %252 = vmatpush.msra.mxu0 0.0
    %253 = vmatpush.msra.mxu0 0.0
    %254 = vmatpush.msra.mxu0 0.0
    %255 = vmatpush.msra.mxu0 0.0
    %256 = vmatpush.msra.mxu0 0.0
    %257 = vmatpush.msra.mxu0 0.0
    %258 = vmatpush.msra.mxu0 0.0
    %259 = vmatpush.msra.mxu0 0.0
    %260 = vmatpush.msra.mxu0 0.0
    %261 = vmatpush.msra.mxu0 0.0
    %262 = vmatpush.msra.mxu0 0.0
    %263 = vmatpush.msra.mxu0 0.0
    %264 = vmatpush.msra.mxu0 0.0
    %265 = vmatpush.msra.mxu0 0.0
    %266 = vmatpush.msra.mxu0 0.0
    %267 = vmatpush.msra.mxu0 %v250
    %268 = vmatmul.f32.gmra.mxu0 %v247
    %v269 = vpop.f32.mrf.mxu0
    %v270 = vadd.f32 0.0, %v269
    %271 = vdwg.mxu0
    %v272 = vadd.f32 %v242, %v270
    %v273 = vadd.f32 %v272, %v163
    %s274 = scalar_lea.vmem [#allocation3], 8
    %275 = vst [vmem:[%s274] sm:$0xff] %v273
    // Predicated region
    $region18: #{tpu_custom_call.1} parent=1 // pred_check
      _
    $region19: #{tpu_custom_call.1} parent=1 // pred_check_branch
      %277 = sbr.rel (0) target = $region21
    $region20: #{tpu_custom_call.1} parent=1 // pred_region
      %279 = vsyncadd [#allocation4], 0
      %s280 = sshll.u32 [#allocation3], 4
      %s281 = int_to_ptr.vmem [resolvable:$true] %s280
      %s282 = sshll.u32 %s4, 4
      %s283 = int_to_ptr.hbm [resolvable:$true] %s282
      %288 = dma.vmem_to_hbm [thread:$0]  %s281, 256, %s283, [#allocation4], 128, 128, 8
    $region21: #{tpu_custom_call.1} parent=1 // pred_fallthru
      _
    // Predicated region
    $region22: #{tpu_custom_call.1} parent=1 // pred_check
      _
    $region23: #{tpu_custom_call.1} parent=1 // pred_check_branch
      %290 = sbr.rel (0) target = $region25
    $region24: #{tpu_custom_call.1} parent=1 // pred_region
      %292 = dma.done [#allocation4], 256
    $region25: #{tpu_custom_call.1} parent=1 // pred_fallthru
      _
    %293 = vsyncpa [#allocation4], 1

</llo_original>
